<compile_context>
chip_gen: v5e
topology: v5e:2x2
jax: 0.10.0
libtpu: 0.0.40
codegen_flags: <defaults>
</compile_context>

<pallas_src>
import jax
import jax.numpy as jnp
from jax.experimental import pallas as pl
from jax.experimental.pallas import tpu as pltpu

BN_EPS = 1e-5


def _round_up(x, m):
    return ((x + m - 1) // m) * m


def aux_head_kernel(x_ref, w1_ref, b1_ref, w2_ref, b2_ref, wc_ref, bc_ref, o_ref):
    # conv1 (1x1, no bias, BN scale pre-folded into weights) + bias + ReLU.
    h1 = jnp.dot(x_ref[...], w1_ref[...], preferred_element_type=jnp.float32)
    h1 = jnp.maximum(h1 + b1_ref[...], 0.0)
    # conv2 (1x1) + folded-BN bias + ReLU.
    h2 = jnp.dot(h1.astype(jnp.bfloat16), w2_ref[...],
                 preferred_element_type=jnp.float32)
    h2 = jnp.maximum(h2 + b2_ref[...], 0.0)
    # classifier: Linear(768, num_classes) (N padded to a full 128-lane).
    out = jnp.dot(h2.astype(jnp.bfloat16), wc_ref[...],
                  preferred_element_type=jnp.float32)
    o_ref[...] = (out + bc_ref[...]).astype(o_ref.dtype)   # bf16 store (lane-dense)


def fold_bn(gamma, beta, rmean, rvar):
    scale = gamma / jnp.sqrt(rvar + BN_EPS)
    bias = beta - rmean * scale
    return scale, bias


def _prep_weights(params, num_classes, nc_pad):
    (w1, g1, be1, rm1, rv1, w2, g2, be2, rm2, rv2, wc, bc) = params
    s1, b1 = fold_bn(g1, be1, rm1, rv1)
    s2, b2 = fold_bn(g2, be2, rm2, rv2)
    # conv weight (out, in, 1, 1) -> (in, out); BN scale folded into out-columns.
    w1m = (w1.reshape(w1.shape[0], w1.shape[1]).T * s1[None, :]).astype(jnp.bfloat16)
    w2m = (w2.reshape(w2.shape[0], w2.shape[1]).T * s2[None, :]).astype(jnp.bfloat16)
    # linear weight (nc, 768) -> (768, nc_pad), zero-padded to lane width.
    wcm = jnp.zeros((wc.shape[1], nc_pad), jnp.float32).at[:, :num_classes].set(wc.T)
    wcm = wcm.astype(jnp.bfloat16)
    bcm = jnp.zeros((1, nc_pad), jnp.float32).at[:, :num_classes].set(bc[None, :])
    return w1m, b1.reshape(1, -1), w2m, b2.reshape(1, -1), wcm, bcm


def _tile_plan(M, tm_max):
    # >= 2 steps and an even count so v7x's two TensorCores split the grid
    # evenly; tm a multiple of 8 sublanes, derived from M (minimal padding).
    n_tiles = max(2, pl.cdiv(M, tm_max))
    n_tiles = _round_up(n_tiles, 2)
    tm = _round_up(pl.cdiv(M, n_tiles), 8)
    m_pad = n_tiles * tm
    return n_tiles, tm, m_pad


def auxiliary_head(x_nchw, params, *, tm_max=1024):
    B, C, H, W = x_nchw.shape
    M = B * H * W
    num_classes = params[-2].shape[0]
    nc_pad = _round_up(num_classes, 128)

    n_tiles, tm, m_pad = _tile_plan(M, tm_max)

    # NCHW -> per-point rows (M, C); bf16 cast fused with the transpose, then a
    # small (< 8 rows/tile) zero pad so every block is full.
    x_rows = jnp.transpose(x_nchw.astype(jnp.bfloat16), (0, 2, 3, 1)).reshape(M, C)
    x_rows = jnp.pad(x_rows, ((0, m_pad - M), (0, 0)))

    w1m, b1, w2m, b2, wcm, bcm = _prep_weights(params, num_classes, nc_pad)

    flops = 2 * m_pad * (C * 128 + 128 * 768 + 768 * nc_pad)
    bytes_accessed = (x_rows.size * 2 + m_pad * nc_pad * 2
                      + (w1m.size + w2m.size + wcm.size) * 2
                      + (b1.size + b2.size + bcm.size) * 4)

    full = lambda i: (0, 0)
    out = pl.pallas_call(
        aux_head_kernel,
        out_shape=jax.ShapeDtypeStruct((m_pad, nc_pad), jnp.bfloat16),
        grid_spec=pltpu.PrefetchScalarGridSpec(
            num_scalar_prefetch=0,
            grid=(n_tiles,),
            in_specs=[
                pl.BlockSpec((tm, C), lambda i: (i, 0)),   # activations, row-tiled
                pl.BlockSpec(w1m.shape, full),             # (C, 128)      bf16
                pl.BlockSpec(b1.shape, full),              # (1, 128)      f32
                pl.BlockSpec(w2m.shape, full),             # (128, 768)    bf16
                pl.BlockSpec(b2.shape, full),              # (1, 768)      f32
                pl.BlockSpec(wcm.shape, full),             # (768, nc_pad) bf16
                pl.BlockSpec(bcm.shape, full),             # (1, nc_pad)   f32
            ],
            out_specs=pl.BlockSpec((tm, nc_pad), lambda i: (i, 0)),
        ),
        compiler_params=pltpu.CompilerParams(
            dimension_semantics=("parallel",)),
        cost_estimate=pl.CostEstimate(
            flops=flops, transcendentals=0, bytes_accessed=bytes_accessed),
    )(x_rows, w1m, b1, w2m, b2, wcm, bcm)

    # TODO(synk): the PyTorch forward applies nn.Linear(768, nc) directly to the
    # NCHW conv output; we apply it per point over the 768-dim channel features
    # (the intended semantics) and return NHWC (B, H, W, num_classes).
    return out[:M, :num_classes].astype(jnp.float32).reshape(B, H, W, num_classes)


def reference(x_nchw, params):
    # Pure-JAX reference with the same bf16-in / f32-accumulate / bf16-out
    # quantization as the kernel.
    B, C, H, W = x_nchw.shape
    num_classes = params[-2].shape[0]
    nc_pad = _round_up(num_classes, 128)
    x_rows = jnp.transpose(x_nchw.astype(jnp.bfloat16), (0, 2, 3, 1)).reshape(B * H * W, C)
    w1m, b1, w2m, b2, wcm, bcm = _prep_weights(params, num_classes, nc_pad)
    h1 = jnp.maximum(
        jnp.dot(x_rows, w1m, preferred_element_type=jnp.float32) + b1, 0.0)
    h2 = jnp.maximum(
        jnp.dot(h1.astype(jnp.bfloat16), w2m, preferred_element_type=jnp.float32)
        + b2, 0.0)
    out = jnp.dot(h2.astype(jnp.bfloat16), wcm,
                  preferred_element_type=jnp.float32) + bcm
    out = out.astype(jnp.bfloat16).astype(jnp.float32)
    return out[:, :num_classes].reshape(B, H, W, num_classes)


def init_params(key, C, num_classes):
    ks = jax.random.split(key, 12)
    w1 = jax.random.normal(ks[0], (128, C, 1, 1), jnp.float32) * 0.1
    g1 = 1.0 + 0.05 * jax.random.normal(ks[1], (128,), jnp.float32)
    be1 = 0.05 * jax.random.normal(ks[2], (128,), jnp.float32)
    rm1 = 0.05 * jax.random.normal(ks[3], (128,), jnp.float32)
    rv1 = jnp.abs(1.0 + 0.05 * jax.random.normal(ks[4], (128,), jnp.float32))
    w2 = jax.random.normal(ks[5], (768, 128, 1, 1), jnp.float32) * 0.05
    g2 = 1.0 + 0.05 * jax.random.normal(ks[6], (768,), jnp.float32)
    be2 = 0.05 * jax.random.normal(ks[7], (768,), jnp.float32)
    rm2 = 0.05 * jax.random.normal(ks[8], (768,), jnp.float32)
    rv2 = jnp.abs(1.0 + 0.05 * jax.random.normal(ks[9], (768,), jnp.float32))
    wc = jax.random.normal(ks[10], (num_classes, 768), jnp.float32) * 0.03
    bc = 0.01 * jax.random.normal(ks[11], (num_classes,), jnp.float32)
    return (w1, g1, be1, rm1, rv1, w2, g2, be2, rm2, rv2, wc, bc)


if __name__ == "__main__":
    B, C, N, W = 2, 4, 16, 1        # (batch, channels, num_points, 1) NCHW
    num_classes = 10

    key = jax.random.PRNGKey(0)
    kx, kp = jax.random.split(key)
    x = jax.random.normal(kx, (B, C, N, W), jnp.float32)
    params = init_params(kp, C, num_classes)

    out = auxiliary_head(x, params)
    out = jax.block_until_ready(out)

    ref = reference(x, params)
    assert out.shape == (B, N, W, num_classes)
    assert jnp.allclose(out, ref, atol=2e-2, rtol=2e-2), "mismatch vs reference"
    print("KERNEL_OK")
</pallas_src>

<mosaic_0001>
module attributes {stable_mosaic.version = 11 : i64} {
  func.func @aux_head_kernel(%arg0: i32, %arg1: memref<16x4xbf16, #tpu.memory_space<vmem>>, %arg2: memref<4x128xbf16, #tpu.memory_space<vmem>>, %arg3: memref<1x128xf32, #tpu.memory_space<vmem>>, %arg4: memref<128x768xbf16, #tpu.memory_space<vmem>>, %arg5: memref<1x768xf32, #tpu.memory_space<vmem>>, %arg6: memref<768x128xbf16, #tpu.memory_space<vmem>>, %arg7: memref<1x128xf32, #tpu.memory_space<vmem>>, %arg8: memref<16x128xbf16, #tpu.memory_space<vmem>>) attributes {dimension_semantics = [#tpu.dimension_semantics<parallel>], iteration_bounds = array<i64: 2>, scalar_prefetch = 0 : i64, scratch_operands = 0 : i64, tpu.core_type = #tpu.core_type<tc>, window_params = [{transform_indices = @transform_0, window_bounds = array<i64: 16, 4>}, {pipeline_mode = #tpu.pipeline_mode<synchronous>, transform_indices = @transform_1, window_bounds = array<i64: 4, 128>}, {pipeline_mode = #tpu.pipeline_mode<synchronous>, transform_indices = @transform_2, window_bounds = array<i64: 1, 128>}, {pipeline_mode = #tpu.pipeline_mode<synchronous>, transform_indices = @transform_3, window_bounds = array<i64: 128, 768>}, {pipeline_mode = #tpu.pipeline_mode<synchronous>, transform_indices = @transform_4, window_bounds = array<i64: 1, 768>}, {pipeline_mode = #tpu.pipeline_mode<synchronous>, transform_indices = @transform_5, window_bounds = array<i64: 768, 128>}, {pipeline_mode = #tpu.pipeline_mode<synchronous>, transform_indices = @transform_6, window_bounds = array<i64: 1, 128>}, {transform_indices = @transform_7, window_bounds = array<i64: 16, 128>}]} {
    %c0 = arith.constant 0 : index
    %c0_0 = arith.constant 0 : index
    %0 = vector.load %arg1[%c0, %c0_0] : memref<16x4xbf16, #tpu.memory_space<vmem>>, vector<16x4xbf16>
    %c0_1 = arith.constant 0 : index
    %c0_2 = arith.constant 0 : index
    %1 = vector.load %arg2[%c0_1, %c0_2] : memref<4x128xbf16, #tpu.memory_space<vmem>>, vector<4x128xbf16>
    %cst = arith.constant dense<0.000000e+00> : vector<16x128xf32>
    %2 = tpu.matmul %0, %1, %cst {dimension_numbers = #tpu.dot_dimension_numbers<[1], [0], [0], [1], [0, 0, 1, 1], [], []>} : vector<16x4xbf16>, vector<4x128xbf16>, vector<16x128xf32> -> vector<16x128xf32>
    %c0_3 = arith.constant 0 : index
    %c0_4 = arith.constant 0 : index
    %3 = vector.load %arg3[%c0_3, %c0_4] : memref<1x128xf32, #tpu.memory_space<vmem>>, vector<1x128xf32>
    %4 = vector.broadcast %3 : vector<1x128xf32> to vector<16x128xf32>
    %5 = arith.addf %2, %4 : vector<16x128xf32>
    %cst_5 = arith.constant 0.000000e+00 : f32
    %6 = vector.broadcast %cst_5 : f32 to vector<16x128xf32>
    %7 = arith.maximumf %5, %6 : vector<16x128xf32>
    %8 = arith.truncf %7 : vector<16x128xf32> to vector<16x128xbf16>
    %c0_6 = arith.constant 0 : index
    %c0_7 = arith.constant 0 : index
    %9 = vector.load %arg4[%c0_6, %c0_7] : memref<128x768xbf16, #tpu.memory_space<vmem>>, vector<128x768xbf16>
    %cst_8 = arith.constant dense<0.000000e+00> : vector<16x768xf32>
    %10 = tpu.matmul %8, %9, %cst_8 {dimension_numbers = #tpu.dot_dimension_numbers<[1], [0], [0], [1], [0, 0, 1, 1], [], []>} : vector<16x128xbf16>, vector<128x768xbf16>, vector<16x768xf32> -> vector<16x768xf32>
    %c0_9 = arith.constant 0 : index
    %c0_10 = arith.constant 0 : index
    %11 = vector.load %arg5[%c0_9, %c0_10] : memref<1x768xf32, #tpu.memory_space<vmem>>, vector<1x768xf32>
    %12 = vector.broadcast %11 : vector<1x768xf32> to vector<16x768xf32>
    %13 = arith.addf %10, %12 : vector<16x768xf32>
    %cst_11 = arith.constant 0.000000e+00 : f32
    %14 = vector.broadcast %cst_11 : f32 to vector<16x768xf32>
    %15 = arith.maximumf %13, %14 : vector<16x768xf32>
    %16 = arith.truncf %15 : vector<16x768xf32> to vector<16x768xbf16>
    %c0_12 = arith.constant 0 : index
    %c0_13 = arith.constant 0 : index
    %17 = vector.load %arg6[%c0_12, %c0_13] : memref<768x128xbf16, #tpu.memory_space<vmem>>, vector<768x128xbf16>
    %cst_14 = arith.constant dense<0.000000e+00> : vector<16x128xf32>
    %18 = tpu.matmul %16, %17, %cst_14 {dimension_numbers = #tpu.dot_dimension_numbers<[1], [0], [0], [1], [0, 0, 1, 1], [], []>} : vector<16x768xbf16>, vector<768x128xbf16>, vector<16x128xf32> -> vector<16x128xf32>
    %c0_15 = arith.constant 0 : index
    %c0_16 = arith.constant 0 : index
    %19 = vector.load %arg7[%c0_15, %c0_16] : memref<1x128xf32, #tpu.memory_space<vmem>>, vector<1x128xf32>
    %20 = vector.broadcast %19 : vector<1x128xf32> to vector<16x128xf32>
    %21 = arith.addf %18, %20 : vector<16x128xf32>
    %22 = arith.truncf %21 : vector<16x128xf32> to vector<16x128xbf16>
    %c0_17 = arith.constant 0 : index
    %c0_18 = arith.constant 0 : index
    %23 = vector.load %arg8[%c0_17, %c0_18] : memref<16x128xbf16, #tpu.memory_space<vmem>>, vector<16x128xbf16>
    tpu.vector_store %arg8[%c0_17, %c0_18], %22 {strides = array<i32>} : memref<16x128xbf16, #tpu.memory_space<vmem>>, vector<16x128xbf16>,
    return
  }
  func.func @transform_0(%arg0: i32) -> (i32, i32) {
    %c0_i32 = arith.constant 0 : i32
    %c0_i32_0 = arith.constant 0 : i32
    return %arg0, %c0_i32 : i32, i32
  }
  func.func @transform_1(%arg0: i32) -> (i32, i32) {
    %c0_i32 = arith.constant 0 : i32
    %c0_i32_0 = arith.constant 0 : i32
    %c0_i32_1 = arith.constant 0 : i32
    return %c0_i32, %c0_i32_0 : i32, i32
  }
  func.func @transform_2(%arg0: i32) -> (i32, i32) {
    %c0_i32 = arith.constant 0 : i32
    %c0_i32_0 = arith.constant 0 : i32
    %c0_i32_1 = arith.constant 0 : i32
    return %c0_i32, %c0_i32_0 : i32, i32
  }
  func.func @transform_3(%arg0: i32) -> (i32, i32) {
    %c0_i32 = arith.constant 0 : i32
    %c0_i32_0 = arith.constant 0 : i32
    %c0_i32_1 = arith.constant 0 : i32
    return %c0_i32, %c0_i32_0 : i32, i32
  }
  func.func @transform_4(%arg0: i32) -> (i32, i32) {
    %c0_i32 = arith.constant 0 : i32
    %c0_i32_0 = arith.constant 0 : i32
    %c0_i32_1 = arith.constant 0 : i32
    return %c0_i32, %c0_i32_0 : i32, i32
  }
  func.func @transform_5(%arg0: i32) -> (i32, i32) {
    %c0_i32 = arith.constant 0 : i32
    %c0_i32_0 = arith.constant 0 : i32
    %c0_i32_1 = arith.constant 0 : i32
    return %c0_i32, %c0_i32_0 : i32, i32
  }
  func.func @transform_6(%arg0: i32) -> (i32, i32) {
    %c0_i32 = arith.constant 0 : i32
    %c0_i32_0 = arith.constant 0 : i32
    %c0_i32_1 = arith.constant 0 : i32
    return %c0_i32, %c0_i32_0 : i32, i32
  }
  func.func @transform_7(%arg0: i32) -> (i32, i32) {
    %c0_i32 = arith.constant 0 : i32
    %c0_i32_0 = arith.constant 0 : i32
    return %arg0, %c0_i32 : i32, i32
  }
}

</mosaic_0001>

<llo_original>
// kernel: tpu_custom_call.1
$region0: #{tpu_custom_call.1}
  #allocation0 [shape = 'u32[]', space=smem, size = 0x4, offset = 0x4, fixed_abs, tag = 'smem constant byte address 0x4 - core index']
  #allocation1 [shape = 'u32[72,128]{1,0:T(1,128)}', space=vmem, size = 0x9000, scoped, tag = 'internal scratch']
  %s0 = inlined_call_operand.vmem [shape: bf16[32,4], index: 0, kind: input, shape index: {}]
  %s1 = inlined_call_operand.vmem [shape: bf16[4,128], index: 1, kind: input, shape index: {}]
  %s2 = inlined_call_operand.vmem [shape: f32[1,128], index: 2, kind: input, shape index: {}]
  %s3 = inlined_call_operand.hbm [shape: bf16[128,768], index: 3, kind: input, shape index: {}]
  %s4 = inlined_call_operand.vmem [shape: f32[1,768], index: 4, kind: input, shape index: {}]
  %s5 = inlined_call_operand.hbm [shape: bf16[768,128], index: 5, kind: input, shape index: {}]
  %s6 = inlined_call_operand.vmem [shape: f32[1,128], index: 6, kind: input, shape index: {}]
  %s7 = inlined_call_operand.hbm [shape: bf16[32,128], index: 7, kind: output, shape index: {}]
  %s8 = sld [smem:[#allocation0]]
  $region69: #{tpu_custom_call.1} parent=0
    _
  %s10 = ssub.s32 1, %s8
  %s11 = scalar_select 0, %s10, %s8
  $region1: #{tpu_custom_call.1} parent=0
    #allocation2 [shape = 'u8[196608]{0}', space=vmem, size = 0x30000, scoped, tag = 'input window, operand 3, single buffered']
    #allocation3 [shape = 's32[2]{0}', space=sflag, size = 0x8, scoped, tag = 'scoped memory for tpu_custom_call.1']
    #allocation4 [shape = 's32[2]{0}', space=sflag, size = 0x8, scoped, tag = 'scoped memory for tpu_custom_call.1']
    #allocation5 [shape = 'u8[196608]{0}', space=vmem, size = 0x30000, scoped, tag = 'input window, operand 5, single buffered']
    #allocation6 [shape = 's32[1]{0}', space=sflag, size = 0x4, scoped, tag = 'scoped memory for tpu_custom_call.1']
    #allocation7 [shape = 'u8[8192]{0}', space=vmem, size = 0x2000, scoped, tag = 'output window, operand 0']
    %12 = vsyncpa [#allocation3], 0
    %13 = vsyncpa [#allocation6], 0
    %14 = vsyncpa [#allocation4], 0
    %s15 = scalar_lea.sflag [#allocation4], 1
    %16 = vsyncpa %s15, 0
    loop: start=0, step=1, limit=4
    $region2: #{tpu_custom_call.1} parent=1 // loop_pre_header
      _
    $region3: #{tpu_custom_call.1} parent=1 // loop_header
      %s18 = sphi 0, %s22
      %p19 = scmp.ge.s32.totalorder %s18, 4
      %s28 = sphi 0, %s30
      %s31 = sphi 0, %s28
      %s32 = sphi 0, %s31
      %s48 = sphi 0, %s32
      %s52 = sphi 0, %s52
      %s54 = sphi 0, %s52
      %s55 = sphi 0, %s54
      %s69 = sphi 0, %s55
      %s73 = sphi 0, %s73
      %s75 = sphi 0, %s73
      %s76 = sphi 0, %s75
      %s90 = sphi 0, %s76
      %s94 = sphi 0, %s94
      %s96 = sphi 0, %s94
      %s97 = sphi 0, %s96
      %s111 = sphi 0, %s97
      %s115 = sphi 0, %s115
      %s117 = sphi 0, %s115
      %s118 = sphi 0, %s117
      %s132 = sphi 0, %s118
      %s136 = sphi 0, %s136
      %s138 = sphi 0, %s136
      %s139 = sphi 0, %s138
      %s153 = sphi 0, %s139
      %s157 = sphi 0, %s157
      %s159 = sphi 0, %s157
      %s160 = sphi 0, %s159
      %s174 = sphi 0, %s160
      %s180 = sphi 0, %s182
      %s183 = sphi 0, %s180
      %s184 = sphi 0, %s183
      %s200 = sphi 0, %s184
    $region4: #{tpu_custom_call.1} parent=1 // loop_header_branch
      %21 = sbr.rel (%p19) target = $region8
    $region5: #{tpu_custom_call.1} parent=1 // loop_body
      %s23 = ssub.s32 %s18, 1
      %s24 = ssub.s32 %s18, 2
      %s25 = sadd.s32 %s18, 1
      %s26 = ssub.s32 %s18, %s25
      %p27 = scmp.eq.s32.totalorder %s26, 0
      %s29 = sadd.s32 %s28, 1
      %s30 = scalar_select %p27, %s28, %s29
      %p33 = pneg %p27
      %p34 = scmp.eq.s32.totalorder %s18, 1
      %p35 = por %p33, %p34
      %p36 = scmp.ne.s32.totalorder %s28, %s31
      %p37 = scmp.eq.s32.totalorder %s18, 0
      %p38 = por %p36, %p37
      %p39 = scmp.ne.s32.totalorder %s28, %s31
      %p40 = scmp.eq.s32.totalorder %s23, 1
      %p41 = por %p39, %p40
      %p42 = scmp.ne.s32.totalorder %s31, %s32
      %p43 = scmp.eq.s32.totalorder %s23, 0
      %p44 = por %p42, %p43
      %p45 = scmp.ne.s32.totalorder %s31, %s32
      %p46 = scmp.eq.s32.totalorder %s24, 1
      %p47 = por %p45, %p46
      %p49 = scmp.ne.s32.totalorder %s32, %s48
      %p50 = scmp.eq.s32.totalorder %s24, 0
      %p51 = por %p49, %p50
      %s53 = sadd.s32 %s52, 1
      %p56 = scmp.eq.s32.totalorder %s18, 1
      %p57 = scmp.ne.s32.totalorder %s52, %s54
      %p58 = scmp.eq.s32.totalorder %s18, 0
      %p59 = por %p57, %p58
      %p60 = scmp.ne.s32.totalorder %s52, %s54
      %p61 = scmp.eq.s32.totalorder %s23, 1
      %p62 = por %p60, %p61
      %p63 = scmp.ne.s32.totalorder %s54, %s55
      %p64 = scmp.eq.s32.totalorder %s23, 0
      %p65 = por %p63, %p64
      %p66 = scmp.ne.s32.totalorder %s54, %s55
      %p67 = scmp.eq.s32.totalorder %s24, 1
      %p68 = por %p66, %p67
      %p70 = scmp.ne.s32.totalorder %s55, %s69
      %p71 = scmp.eq.s32.totalorder %s24, 0
      %p72 = por %p70, %p71
      %s74 = sadd.s32 %s73, 1
      %p77 = scmp.eq.s32.totalorder %s18, 1
      %p78 = scmp.ne.s32.totalorder %s73, %s75
      %p79 = scmp.eq.s32.totalorder %s18, 0
      %p80 = por %p78, %p79
      %p81 = scmp.ne.s32.totalorder %s73, %s75
      %p82 = scmp.eq.s32.totalorder %s23, 1
      %p83 = por %p81, %p82
      %p84 = scmp.ne.s32.totalorder %s75, %s76
      %p85 = scmp.eq.s32.totalorder %s23, 0
      %p86 = por %p84, %p85
      %p87 = scmp.ne.s32.totalorder %s75, %s76
      %p88 = scmp.eq.s32.totalorder %s24, 1
      %p89 = por %p87, %p88
      %p91 = scmp.ne.s32.totalorder %s76, %s90
      %p92 = scmp.eq.s32.totalorder %s24, 0
      %p93 = por %p91, %p92
      %s95 = sadd.s32 %s94, 1
      %p98 = scmp.eq.s32.totalorder %s18, 1
      %p99 = scmp.ne.s32.totalorder %s94, %s96
      %p100 = scmp.eq.s32.totalorder %s18, 0
      %p101 = por %p99, %p100
      %p102 = scmp.ne.s32.totalorder %s94, %s96
      %p103 = scmp.eq.s32.totalorder %s23, 1
      %p104 = por %p102, %p103
      %p105 = scmp.ne.s32.totalorder %s96, %s97
      %p106 = scmp.eq.s32.totalorder %s23, 0
      %p107 = por %p105, %p106
      %p108 = scmp.ne.s32.totalorder %s96, %s97
      %p109 = scmp.eq.s32.totalorder %s24, 1
      %p110 = por %p108, %p109
      %p112 = scmp.ne.s32.totalorder %s97, %s111
      %p113 = scmp.eq.s32.totalorder %s24, 0
      %p114 = por %p112, %p113
      %s116 = sadd.s32 %s115, 1
      %p119 = scmp.eq.s32.totalorder %s18, 1
      %p120 = scmp.ne.s32.totalorder %s115, %s117
      %p121 = scmp.eq.s32.totalorder %s18, 0
      %p122 = por %p120, %p121
      %p123 = scmp.ne.s32.totalorder %s115, %s117
      %p124 = scmp.eq.s32.totalorder %s23, 1
      %p125 = por %p123, %p124
      %p126 = scmp.ne.s32.totalorder %s117, %s118
      %p127 = scmp.eq.s32.totalorder %s23, 0
      %p128 = por %p126, %p127
      %p129 = scmp.ne.s32.totalorder %s117, %s118
      %p130 = scmp.eq.s32.totalorder %s24, 1
      %p131 = por %p129, %p130
      %p133 = scmp.ne.s32.totalorder %s118, %s132
      %p134 = scmp.eq.s32.totalorder %s24, 0
      %p135 = por %p133, %p134
      %s137 = sadd.s32 %s136, 1
      %p140 = scmp.eq.s32.totalorder %s18, 1
      %p141 = scmp.ne.s32.totalorder %s136, %s138
      %p142 = scmp.eq.s32.totalorder %s18, 0
      %p143 = por %p141, %p142
      %p144 = scmp.ne.s32.totalorder %s136, %s138
      %p145 = scmp.eq.s32.totalorder %s23, 1
      %p146 = por %p144, %p145
      %p147 = scmp.ne.s32.totalorder %s138, %s139
      %p148 = scmp.eq.s32.totalorder %s23, 0
      %p149 = por %p147, %p148
      %p150 = scmp.ne.s32.totalorder %s138, %s139
      %p151 = scmp.eq.s32.totalorder %s24, 1
      %p152 = por %p150, %p151
      %p154 = scmp.ne.s32.totalorder %s139, %s153
      %p155 = scmp.eq.s32.totalorder %s24, 0
      %p156 = por %p154, %p155
      %s158 = sadd.s32 %s157, 1
      %p161 = scmp.eq.s32.totalorder %s18, 1
      %p162 = scmp.ne.s32.totalorder %s157, %s159
      %p163 = scmp.eq.s32.totalorder %s18, 0
      %p164 = por %p162, %p163
      %p165 = scmp.ne.s32.totalorder %s157, %s159
      %p166 = scmp.eq.s32.totalorder %s23, 1
      %p167 = por %p165, %p166
      %p168 = scmp.ne.s32.totalorder %s159, %s160
      %p169 = scmp.eq.s32.totalorder %s23, 0
      %p170 = por %p168, %p169
      %p171 = scmp.ne.s32.totalorder %s159, %s160
      %p172 = scmp.eq.s32.totalorder %s24, 1
      %p173 = por %p171, %p172
      %p175 = scmp.ne.s32.totalorder %s160, %s174
      %p176 = scmp.eq.s32.totalorder %s24, 0
      %p177 = por %p175, %p176
      %s178 = ssub.s32 %s18, %s25
      %p179 = scmp.eq.s32.totalorder %s178, 0
      %s181 = sadd.s32 %s180, 1
      %s182 = scalar_select %p179, %s180, %s181
      %p185 = pneg %p179
      %p186 = scmp.eq.s32.totalorder %s18, 1
      %p187 = por %p185, %p186
      %p188 = scmp.ne.s32.totalorder %s180, %s183
      %p189 = scmp.eq.s32.totalorder %s18, 0
      %p190 = por %p188, %p189
      %p191 = scmp.ne.s32.totalorder %s180, %s183
      %p192 = scmp.eq.s32.totalorder %s23, 1
      %p193 = por %p191, %p192
      %p194 = scmp.ne.s32.totalorder %s183, %s184
      %p195 = scmp.eq.s32.totalorder %s23, 0
      %p196 = por %p194, %p195
      %p197 = scmp.ne.s32.totalorder %s183, %s184
      %p198 = scmp.eq.s32.totalorder %s24, 1
      %p199 = por %p197, %p198
      %p201 = scmp.ne.s32.totalorder %s184, %s200
      %p202 = scmp.eq.s32.totalorder %s24, 0
      %p203 = por %p201, %p202
      %p204 = scmp.le.s32.totalorder 1, %s18
      %p205 = scmp.lt.s32.totalorder %s18, 3
      %p206 = pnand %p204, %p205
      %p207 = pneg %p206
      // Predicated region
      $region9: #{tpu_custom_call.1} parent=5 // pred_check
        _
      $region10: #{tpu_custom_call.1} parent=5 // pred_check_branch
        %209 = sbr.rel (%p206) target = $region12
      $region11: #{tpu_custom_call.1} parent=5 // pred_region
        %s210 = ssub.s32 %s18, 1
        // Predicated region
        $region13: #{tpu_custom_call.1} parent=11 // pred_check
          %p211 = pneg %p65
        $region14: #{tpu_custom_call.1} parent=11 // pred_check_branch
          %213 = sbr.rel (%p211) target = $region16
        $region15: #{tpu_custom_call.1} parent=11 // pred_region
          _
        $region16: #{tpu_custom_call.1} parent=11 // pred_fallthru
          _
        // Predicated region
        $region17: #{tpu_custom_call.1} parent=11 // pred_check
          %p214 = pneg %p86
        $region18: #{tpu_custom_call.1} parent=11 // pred_check_branch
          %216 = sbr.rel (%p214) target = $region20
        $region19: #{tpu_custom_call.1} parent=11 // pred_region
          _
        $region20: #{tpu_custom_call.1} parent=11 // pred_fallthru
          _
        // Predicated region
        $region21: #{tpu_custom_call.1} parent=11 // pred_check
          %p217 = pneg %p107
        $region22: #{tpu_custom_call.1} parent=11 // pred_check_branch
          %219 = sbr.rel (%p217) target = $region24
        $region23: #{tpu_custom_call.1} parent=11 // pred_region
          %221 = vsyncadd [#allocation3], 0
          %s222 = sshll.u32 %s3, 4
          %s223 = int_to_ptr.hbm [resolvable:$true] %s222
          %s224 = sshll.u32 [#allocation2], 4
          %s225 = int_to_ptr.vmem [resolvable:$true] %s224
          %230 = dma.hbm_to_vmem [thread:$0]  %s223, 6144, %s225, [#allocation3], 384, 384, 24
        $region24: #{tpu_custom_call.1} parent=11 // pred_fallthru
          _
        // Predicated region
        $region25: #{tpu_custom_call.1} parent=11 // pred_check
          %p231 = pneg %p128
        $region26: #{tpu_custom_call.1} parent=11 // pred_check_branch
          %233 = sbr.rel (%p231) target = $region28
        $region27: #{tpu_custom_call.1} parent=11 // pred_region
          _
        $region28: #{tpu_custom_call.1} parent=11 // pred_fallthru
          _
        // Predicated region
        $region29: #{tpu_custom_call.1} parent=11 // pred_check
          %p234 = pneg %p149
        $region30: #{tpu_custom_call.1} parent=11 // pred_check_branch
          %236 = sbr.rel (%p234) target = $region32
        $region31: #{tpu_custom_call.1} parent=11 // pred_region
          %238 = vsyncadd [#allocation6], 0
          %s239 = sshll.u32 %s5, 4
          %s240 = int_to_ptr.hbm [resolvable:$true] %s239
          %s241 = sshll.u32 [#allocation5], 4
          %s242 = int_to_ptr.vmem [resolvable:$true] %s241
          %247 = dma.hbm_to_vmem [thread:$0]  %s240, 6144, %s242, [#allocation6], 64, 64, 4
        $region32: #{tpu_custom_call.1} parent=11 // pred_fallthru
          _
        // Predicated region
        $region33: #{tpu_custom_call.1} parent=11 // pred_check
          %p248 = pneg %p170
        $region34: #{tpu_custom_call.1} parent=11 // pred_check_branch
          %250 = sbr.rel (%p248) target = $region36
        $region35: #{tpu_custom_call.1} parent=11 // pred_region
          _
        $region36: #{tpu_custom_call.1} parent=11 // pred_fallthru
          _
      $region12: #{tpu_custom_call.1} parent=5 // pred_fallthru
        _
      %p251 = scmp.lt.s32.totalorder %s18, 2
      // Predicated region
      $region37: #{tpu_custom_call.1} parent=5 // pred_check
        %p252 = pneg %p251
      $region38: #{tpu_custom_call.1} parent=5 // pred_check_branch
        %254 = sbr.rel (%p252) target = $region40
      $region39: #{tpu_custom_call.1} parent=5 // pred_region
        // Predicated region
        $region41: #{tpu_custom_call.1} parent=39 // pred_check
          %p255 = pneg %p38
        $region42: #{tpu_custom_call.1} parent=39 // pred_check_branch
          %257 = sbr.rel (%p255) target = $region44
        $region43: #{tpu_custom_call.1} parent=39 // pred_region
          %s258 = smul.u32 2, %s18
          %p259 = scmp.lt.s32.totalorder %s258, 3
          %s260 = scalar_select %p259, %s258, 3
          %s261 = smul.addr %s260, 4
          %s262 = scalar_lea.vmem %s0, %s261
          %s263 = smul.u32 2, %s18
        $region44: #{tpu_custom_call.1} parent=39 // pred_fallthru
          _
      $region40: #{tpu_custom_call.1} parent=5 // pred_fallthru
        _
      %p264 = scmp.le.s32.totalorder 1, %s18
      %p265 = scmp.lt.s32.totalorder %s18, 3
      %p266 = pnand %p264, %p265
      %p267 = pneg %p266
      // Predicated region
      $region45: #{tpu_custom_call.1} parent=5 // pred_check
        _
      $region46: #{tpu_custom_call.1} parent=5 // pred_check_branch
        %269 = sbr.rel (%p266) target = $region48
      $region47: #{tpu_custom_call.1} parent=5 // pred_region
        %s270 = ssub.s32 %s18, 1
        // Predicated region
        $region49: #{tpu_custom_call.1} parent=47 // pred_check
          %p271 = pneg %p107
        $region50: #{tpu_custom_call.1} parent=47 // pred_check_branch
          %273 = sbr.rel (%p271) target = $region52
        $region51: #{tpu_custom_call.1} parent=47 // pred_region
          %275 = dma.done [#allocation3], 6144
        $region52: #{tpu_custom_call.1} parent=47 // pred_fallthru
          _
        // Predicated region
        $region53: #{tpu_custom_call.1} parent=47 // pred_check
          %p276 = pneg %p149
        $region54: #{tpu_custom_call.1} parent=47 // pred_check_branch
          %278 = sbr.rel (%p276) target = $region56
        $region55: #{tpu_custom_call.1} parent=47 // pred_region
          %280 = dma.done [#allocation6], 6144
        $region56: #{tpu_custom_call.1} parent=47 // pred_fallthru
          _
        %s281 = smul.u32 2, %s23
        %p282 = scmp.lt.s32.totalorder %s281, 3
        %s283 = scalar_select %p282, %s281, 3
        %s284 = smul.addr %s283, 4
        %s285 = scalar_lea.vmem %s0, %s284
        %p286 = pneg %p44
        %p287 = pneg %p41
        %p288 = pneg %p65
        %p289 = pneg %p62
        %p290 = pneg %p86
        %p291 = pneg %p83
        %p292 = pneg %p107
        %p293 = pneg %p104
        %p294 = pneg %p128
        %p295 = pneg %p125
        %p296 = pneg %p149
        %p297 = pneg %p146
        %p298 = pneg %p170
        %p299 = pneg %p167
        %p300 = pneg %p196
        %p301 = pneg %p193
        %s302 = sand.u32 %s183, 1
        %s303 = scalar_lea.sflag [#allocation4], %s302
        %s304 = sand.u32 %s183, 1
        %s305 = smul.addr %s304, 8
        %s306 = scalar_lea.vmem [#allocation7], %s305
        %s307 = smul.u32 2, %s23
        %p308 = scmp.lt.s32.totalorder %s307, 3
        %s309 = scalar_select %p308, %s307, 3
        %s310 = smul.addr %s309, 4
        %s311 = scalar_lea.vmem %s0, %s310
        %s312 = smul.u32 2, %s23
        %s313 = smul.u32 2, %s23
        %v315 = vld [vmem:[%s311] sm:$0xf]
        %v316 = vld [vmem:[%s311 + $0x4] sm:$0xf]
        %v317 = vld [vmem:[%s1] sm:$0x3]
        %v318 = vld [vmem:[%s2] sm:$0x1]
        %v320 = vperm.slane %v318, 0
        %v324 = vunpack.c.l.b16 %v315
        %v325 = vunpack.c.l.b16 %v316
        %v326 = vpack.c.b16 %v325, %v324
        %vm327 = vcmask 31744
        %v329 = vsel %vm327, %v326, 0
        %vm331 = vcmask 1041408
        %v333 = vsel %vm331, %v317, 0
        %335 = vmatpush.bf16.msra.mxu0 0
        %336 = vmatpush.bf16.msra.mxu0 0
        %337 = vmatpush.bf16.msra.mxu0 0
        %338 = vmatpush.bf16.msra.mxu0 0
        %339 = vmatpush.bf16.msra.mxu0 0
        %340 = vmatpush.bf16.msra.mxu0 0
        %341 = vmatpush.bf16.msra.mxu0 0
        %342 = vmatpush.bf16.msra.mxu0 %v333
        %343 = vmatmul.bf16.gmra.mxu0 %v329
        %v344 = vpop.f32.mrf.mxu0
        %v345 = vadd.f32 %v320, %v344
        %v346 = vpop.f32.mrf.mxu0
        %v347 = vadd.f32 %v320, %v346
        %348 = vdwg.mxu0
        %v349 = vmax.f32 %v345, 0.0
        %v350 = vmax.f32 %v347, 0.0
        %v351 = vpack.c.bf16 %v350, %v349
        %v352 = vld [vmem:[#allocation2] sm:$0xff]
        %v353 = vld [vmem:[#allocation2 + $0x8] sm:$0xff]
        %v354 = vld [vmem:[#allocation2 + $0x10] sm:$0xff]
        %v355 = vld [vmem:[#allocation2 + $0x18] sm:$0xff]
        %v356 = vld [vmem:[#allocation2 + $0x20] sm:$0xff]
        %v357 = vld [vmem:[#allocation2 + $0x28] sm:$0xff]
        %v358 = vld [vmem:[#allocation2 + $0x30] sm:$0xff]
        %v359 = vld [vmem:[#allocation2 + $0x38] sm:$0xff]
        %v360 = vld [vmem:[#allocation2 + $0x40] sm:$0xff]
        %v361 = vld [vmem:[#allocation2 + $0x48] sm:$0xff]
        %v362 = vld [vmem:[#allocation2 + $0x50] sm:$0xff]
        %v363 = vld [vmem:[#allocation2 + $0x58] sm:$0xff]
        %v364 = vld [vmem:[#allocation2 + $0x60] sm:$0xff]
        %v365 = vld [vmem:[#allocation2 + $0x68] sm:$0xff]
        %v366 = vld [vmem:[#allocation2 + $0x70] sm:$0xff]
        %v367 = vld [vmem:[#allocation2 + $0x78] sm:$0xff]
        %v368 = vld [vmem:[#allocation2 + $0x80] sm:$0xff]
        %v369 = vld [vmem:[#allocation2 + $0x88] sm:$0xff]
        %v370 = vld [vmem:[#allocation2 + $0x90] sm:$0xff]
        %v371 = vld [vmem:[#allocation2 + $0x98] sm:$0xff]
        %v372 = vld [vmem:[#allocation2 + $0xa0] sm:$0xff]
        %v373 = vld [vmem:[#allocation2 + $0xa8] sm:$0xff]
        %v374 = vld [vmem:[#allocation2 + $0xb0] sm:$0xff]
        %v375 = vld [vmem:[#allocation2 + $0xb8] sm:$0xff]
        %v376 = vld [vmem:[#allocation2 + $0xc0] sm:$0xff]
        %v377 = vld [vmem:[#allocation2 + $0xc8] sm:$0xff]
        %v378 = vld [vmem:[#allocation2 + $0xd0] sm:$0xff]
        %v379 = vld [vmem:[#allocation2 + $0xd8] sm:$0xff]
        %v380 = vld [vmem:[#allocation2 + $0xe0] sm:$0xff]
        %v381 = vld [vmem:[#allocation2 + $0xe8] sm:$0xff]
        %v382 = vld [vmem:[#allocation2 + $0xf0] sm:$0xff]
        %v383 = vld [vmem:[#allocation2 + $0xf8] sm:$0xff]
        %v384 = vld [vmem:[#allocation2 + $0x100] sm:$0xff]
        %v385 = vld [vmem:[#allocation2 + $0x108] sm:$0xff]
        %v386 = vld [vmem:[#allocation2 + $0x110] sm:$0xff]
        %v387 = vld [vmem:[#allocation2 + $0x118] sm:$0xff]
        %v388 = vld [vmem:[#allocation2 + $0x120] sm:$0xff]
        %v389 = vld [vmem:[#allocation2 + $0x128] sm:$0xff]
        %v390 = vld [vmem:[#allocation2 + $0x130] sm:$0xff]
        %v391 = vld [vmem:[#allocation2 + $0x138] sm:$0xff]
        %v392 = vld [vmem:[#allocation2 + $0x140] sm:$0xff]
        %v393 = vld [vmem:[#allocation2 + $0x148] sm:$0xff]
        %v394 = vld [vmem:[#allocation2 + $0x150] sm:$0xff]
        %v395 = vld [vmem:[#allocation2 + $0x158] sm:$0xff]
        %v396 = vld [vmem:[#allocation2 + $0x160] sm:$0xff]
        %v397 = vld [vmem:[#allocation2 + $0x168] sm:$0xff]
        %v398 = vld [vmem:[#allocation2 + $0x170] sm:$0xff]
        %v399 = vld [vmem:[#allocation2 + $0x178] sm:$0xff]
        %v400 = vld [vmem:[%s4] sm:$0x3f]
        %v402 = vperm.slane %v400, 0
        %v403 = vperm.slane %v400, 1
        %v404 = vperm.slane %v400, 2
        %v405 = vperm.slane %v400, 3
        %v406 = vperm.slane %v400, 4
        %v407 = vperm.slane %v400, 5
        %v462 = vunpack.c.l.b16 %v352
        %v463 = vunpack.c.h.b16 %v352
        %v464 = vunpack.c.l.b16 %v353
        %v465 = vunpack.c.h.b16 %v353
        %v466 = vunpack.c.l.b16 %v354
        %v467 = vunpack.c.h.b16 %v354
        %v468 = vunpack.c.l.b16 %v355
        %v469 = vunpack.c.h.b16 %v355
        %v470 = vunpack.c.l.b16 %v356
        %v471 = vunpack.c.h.b16 %v356
        %v472 = vunpack.c.l.b16 %v357
        %v473 = vunpack.c.h.b16 %v357
        %v474 = vunpack.c.l.b16 %v358
        %v475 = vunpack.c.h.b16 %v358
        %v476 = vunpack.c.l.b16 %v359
        %v477 = vunpack.c.h.b16 %v359
        %v478 = vunpack.c.l.b16 %v360
        %v479 = vunpack.c.h.b16 %v360
        %v480 = vunpack.c.l.b16 %v361
        %v481 = vunpack.c.h.b16 %v361
        %v482 = vunpack.c.l.b16 %v362
        %v483 = vunpack.c.h.b16 %v362
        %v484 = vunpack.c.l.b16 %v363
        %v485 = vunpack.c.h.b16 %v363
        %v486 = vunpack.c.l.b16 %v364
        %v487 = vunpack.c.h.b16 %v364
        %v488 = vunpack.c.l.b16 %v365
        %v489 = vunpack.c.h.b16 %v365
        %v490 = vunpack.c.l.b16 %v366
        %v491 = vunpack.c.h.b16 %v366
        %v492 = vunpack.c.l.b16 %v367
        %v493 = vunpack.c.h.b16 %v367
        %v494 = vunpack.c.l.b16 %v368
        %v495 = vunpack.c.h.b16 %v368
        %v496 = vunpack.c.l.b16 %v369
        %v497 = vunpack.c.h.b16 %v369
        %v498 = vunpack.c.l.b16 %v370
        %v499 = vunpack.c.h.b16 %v370
        %v500 = vunpack.c.l.b16 %v371
        %v501 = vunpack.c.h.b16 %v371
        %v502 = vunpack.c.l.b16 %v372
        %v503 = vunpack.c.h.b16 %v372
        %v504 = vunpack.c.l.b16 %v373
        %v505 = vunpack.c.h.b16 %v373
        %v506 = vunpack.c.l.b16 %v374
        %v507 = vunpack.c.h.b16 %v374
        %v508 = vunpack.c.l.b16 %v375
        %v509 = vunpack.c.h.b16 %v375
        %v510 = vunpack.c.l.b16 %v376
        %v511 = vunpack.c.h.b16 %v376
        %v512 = vunpack.c.l.b16 %v377
        %v513 = vunpack.c.h.b16 %v377
        %v514 = vunpack.c.l.b16 %v378
        %v515 = vunpack.c.h.b16 %v378
        %v516 = vunpack.c.l.b16 %v379
        %v517 = vunpack.c.h.b16 %v379
        %v518 = vunpack.c.l.b16 %v380
        %v519 = vunpack.c.h.b16 %v380
        %v520 = vunpack.c.l.b16 %v381
        %v521 = vunpack.c.h.b16 %v381
        %v522 = vunpack.c.l.b16 %v382
        %v523 = vunpack.c.h.b16 %v382
        %v524 = vunpack.c.l.b16 %v383
        %v525 = vunpack.c.h.b16 %v383
        %v526 = vunpack.c.l.b16 %v384
        %v527 = vunpack.c.h.b16 %v384
        %v528 = vunpack.c.l.b16 %v385
        %v529 = vunpack.c.h.b16 %v385
        %v530 = vunpack.c.l.b16 %v386
        %v531 = vunpack.c.h.b16 %v386
        %v532 = vunpack.c.l.b16 %v387
        %v533 = vunpack.c.h.b16 %v387
        %v534 = vunpack.c.l.b16 %v388
        %v535 = vunpack.c.h.b16 %v388
        %v536 = vunpack.c.l.b16 %v389
        %v537 = vunpack.c.h.b16 %v389
        %v538 = vunpack.c.l.b16 %v390
        %v539 = vunpack.c.h.b16 %v390
        %v540 = vunpack.c.l.b16 %v391
        %v541 = vunpack.c.h.b16 %v391
        %v542 = vunpack.c.l.b16 %v392
        %v543 = vunpack.c.h.b16 %v392
        %v544 = vunpack.c.l.b16 %v393
        %v545 = vunpack.c.h.b16 %v393
        %v546 = vunpack.c.l.b16 %v394
        %v547 = vunpack.c.h.b16 %v394
        %v548 = vunpack.c.l.b16 %v395
        %v549 = vunpack.c.h.b16 %v395
        %v550 = vunpack.c.l.b16 %v396
        %v551 = vunpack.c.h.b16 %v396
        %v552 = vunpack.c.l.b16 %v397
        %v553 = vunpack.c.h.b16 %v397
        %v554 = vunpack.c.l.b16 %v398
        %v555 = vunpack.c.h.b16 %v398
        %v556 = vunpack.c.l.b16 %v399
        %v557 = vunpack.c.h.b16 %v399
        %v558 = vpack.c.b16 %v468, %v462
        %v559 = vpack.c.b16 %v469, %v463
        %v560 = vpack.c.b16 %v470, %v464
        %v561 = vpack.c.b16 %v471, %v465
        %v562 = vpack.c.b16 %v472, %v466
        %v563 = vpack.c.b16 %v473, %v467
        %v564 = vpack.c.b16 %v480, %v474
        %v565 = vpack.c.b16 %v481, %v475
        %v566 = vpack.c.b16 %v482, %v476
        %v567 = vpack.c.b16 %v483, %v477
        %v568 = vpack.c.b16 %v484, %v478
        %v569 = vpack.c.b16 %v485, %v479
        %v570 = vpack.c.b16 %v492, %v486
        %v571 = vpack.c.b16 %v493, %v487
        %v572 = vpack.c.b16 %v494, %v488
        %v573 = vpack.c.b16 %v495, %v489
        %v574 = vpack.c.b16 %v496, %v490
        %v575 = vpack.c.b16 %v497, %v491
        %v576 = vpack.c.b16 %v504, %v498
        %v577 = vpack.c.b16 %v505, %v499
        %v578 = vpack.c.b16 %v506, %v500
        %v579 = vpack.c.b16 %v507, %v501
        %v580 = vpack.c.b16 %v508, %v502
        %v581 = vpack.c.b16 %v509, %v503
        %v582 = vpack.c.b16 %v516, %v510
        %v583 = vpack.c.b16 %v517, %v511
        %v584 = vpack.c.b16 %v518, %v512
        %v585 = vpack.c.b16 %v519, %v513
        %v586 = vpack.c.b16 %v520, %v514
        %v587 = vpack.c.b16 %v521, %v515
        %v588 = vpack.c.b16 %v528, %v522
        %v589 = vpack.c.b16 %v529, %v523
        %v590 = vpack.c.b16 %v530, %v524
        %v591 = vpack.c.b16 %v531, %v525
        %v592 = vpack.c.b16 %v532, %v526
        %v593 = vpack.c.b16 %v533, %v527
        %v594 = vpack.c.b16 %v540, %v534
        %v595 = vpack.c.b16 %v541, %v535
        %v596 = vpack.c.b16 %v542, %v536
        %v597 = vpack.c.b16 %v543, %v537
        %v598 = vpack.c.b16 %v544, %v538
        %v599 = vpack.c.b16 %v545, %v539
        %v600 = vpack.c.b16 %v552, %v546
        %v601 = vpack.c.b16 %v553, %v547
        %v602 = vpack.c.b16 %v554, %v548
        %v603 = vpack.c.b16 %v555, %v549
        %v604 = vpack.c.b16 %v556, %v550
        %v605 = vpack.c.b16 %v557, %v551
        %654 = vmatpush.bf16.msra.mxu0 %v600
        %655 = vmatpush.bf16.msra.mxu0 %v594
        %656 = vmatpush.bf16.msra.mxu0 %v588
        %657 = vmatpush.bf16.msra.mxu0 %v582
        %658 = vmatpush.bf16.msra.mxu0 %v576
        %659 = vmatpush.bf16.msra.mxu0 %v570
        %660 = vmatpush.bf16.msra.mxu0 %v564
        %661 = vmatpush.bf16.msra.mxu0 %v558
        %662 = vmatmul.bf16.gmra.mxu0 %v351
        %v663 = vpop.f32.mrf.mxu0
        %v664 = vadd.f32 %v402, %v663
        %v665 = vpop.f32.mrf.mxu0
        %v666 = vadd.f32 %v402, %v665
        %667 = vdwg.mxu0
        %668 = vmatpush.bf16.msra.mxu0 %v601
        %669 = vmatpush.bf16.msra.mxu0 %v595
        %670 = vmatpush.bf16.msra.mxu0 %v589
        %671 = vmatpush.bf16.msra.mxu0 %v583
        %672 = vmatpush.bf16.msra.mxu0 %v577
        %673 = vmatpush.bf16.msra.mxu0 %v571
        %674 = vmatpush.bf16.msra.mxu0 %v565
        %675 = vmatpush.bf16.msra.mxu0 %v559
        %676 = vmatmul.bf16.gmra.mxu0 %v351
        %v677 = vpop.f32.mrf.mxu0
        %v678 = vadd.f32 %v403, %v677
        %v679 = vpop.f32.mrf.mxu0
        %v680 = vadd.f32 %v403, %v679
        %681 = vdwg.mxu0
        %682 = vmatpush.bf16.msra.mxu0 %v602
        %683 = vmatpush.bf16.msra.mxu0 %v596
        %684 = vmatpush.bf16.msra.mxu0 %v590
        %685 = vmatpush.bf16.msra.mxu0 %v584
        %686 = vmatpush.bf16.msra.mxu0 %v578
        %687 = vmatpush.bf16.msra.mxu0 %v572
        %688 = vmatpush.bf16.msra.mxu0 %v566
        %689 = vmatpush.bf16.msra.mxu0 %v560
        %690 = vmatmul.bf16.gmra.mxu0 %v351
        %v691 = vpop.f32.mrf.mxu0
        %v692 = vadd.f32 %v404, %v691
        %v693 = vpop.f32.mrf.mxu0
        %v694 = vadd.f32 %v404, %v693
        %695 = vdwg.mxu0
        %696 = vmatpush.bf16.msra.mxu0 %v603
        %697 = vmatpush.bf16.msra.mxu0 %v597
        %698 = vmatpush.bf16.msra.mxu0 %v591
        %699 = vmatpush.bf16.msra.mxu0 %v585
        %700 = vmatpush.bf16.msra.mxu0 %v579
        %701 = vmatpush.bf16.msra.mxu0 %v573
        %702 = vmatpush.bf16.msra.mxu0 %v567
        %703 = vmatpush.bf16.msra.mxu0 %v561
        %704 = vmatmul.bf16.gmra.mxu0 %v351
        %v705 = vpop.f32.mrf.mxu0
        %v706 = vadd.f32 %v405, %v705
        %v707 = vpop.f32.mrf.mxu0
        %v708 = vadd.f32 %v405, %v707
        %709 = vdwg.mxu0
        %710 = vmatpush.bf16.msra.mxu0 %v604
        %711 = vmatpush.bf16.msra.mxu0 %v598
        %712 = vmatpush.bf16.msra.mxu0 %v592
        %713 = vmatpush.bf16.msra.mxu0 %v586
        %714 = vmatpush.bf16.msra.mxu0 %v580
        %715 = vmatpush.bf16.msra.mxu0 %v574
        %716 = vmatpush.bf16.msra.mxu0 %v568
        %717 = vmatpush.bf16.msra.mxu0 %v562
        %718 = vmatmul.bf16.gmra.mxu0 %v351
        %v719 = vpop.f32.mrf.mxu0
        %v720 = vadd.f32 %v406, %v719
        %v721 = vpop.f32.mrf.mxu0
        %v722 = vadd.f32 %v406, %v721
        %723 = vdwg.mxu0
        %724 = vmatpush.bf16.msra.mxu0 %v605
        %725 = vmatpush.bf16.msra.mxu0 %v599
        %726 = vmatpush.bf16.msra.mxu0 %v593
        %727 = vmatpush.bf16.msra.mxu0 %v587
        %728 = vmatpush.bf16.msra.mxu0 %v581
        %729 = vmatpush.bf16.msra.mxu0 %v575
        %730 = vmatpush.bf16.msra.mxu0 %v569
        %731 = vmatpush.bf16.msra.mxu0 %v563
        %732 = vmatmul.bf16.gmra.mxu0 %v351
        %v733 = vpop.f32.mrf.mxu0
        %v734 = vadd.f32 %v407, %v733
        %v735 = vpop.f32.mrf.mxu0
        %v736 = vadd.f32 %v407, %v735
        %737 = vdwg.mxu0
        %v738 = vmax.f32 %v664, 0.0
        %v739 = vmax.f32 %v678, 0.0
        %v740 = vmax.f32 %v692, 0.0
        %v741 = vmax.f32 %v706, 0.0
        %v742 = vmax.f32 %v720, 0.0
        %v743 = vmax.f32 %v734, 0.0
        %v744 = vmax.f32 %v666, 0.0
        %v745 = vmax.f32 %v680, 0.0
        %v746 = vmax.f32 %v694, 0.0
        %v747 = vmax.f32 %v708, 0.0
        %v748 = vmax.f32 %v722, 0.0
        %v749 = vmax.f32 %v736, 0.0
        %v750 = vpack.c.bf16 %v744, %v738
        %v751 = vpack.c.bf16 %v745, %v739
        %v752 = vpack.c.bf16 %v746, %v740
        %v753 = vpack.c.bf16 %v747, %v741
        %v754 = vpack.c.bf16 %v748, %v742
        %v755 = vpack.c.bf16 %v749, %v743
        %v756 = vld [vmem:[#allocation5] sm:$0xf]
        %v757 = vld [vmem:[#allocation5 + $0x4] sm:$0xf]
        %v758 = vld [vmem:[#allocation5 + $0x8] sm:$0xf]
        %v759 = vld [vmem:[#allocation5 + $0xc] sm:$0xf]
        %v760 = vld [vmem:[#allocation5 + $0x10] sm:$0xf]
        %v761 = vld [vmem:[#allocation5 + $0x14] sm:$0xf]
        %v762 = vld [vmem:[#allocation5 + $0x18] sm:$0xf]
        %v763 = vld [vmem:[#allocation5 + $0x1c] sm:$0xf]
        %v764 = vld [vmem:[#allocation5 + $0x20] sm:$0xf]
        %v765 = vld [vmem:[#allocation5 + $0x24] sm:$0xf]
        %v766 = vld [vmem:[#allocation5 + $0x28] sm:$0xf]
        %v767 = vld [vmem:[#allocation5 + $0x2c] sm:$0xf]
        %v768 = vld [vmem:[#allocation5 + $0x30] sm:$0xf]
        %v769 = vld [vmem:[#allocation5 + $0x34] sm:$0xf]
        %v770 = vld [vmem:[#allocation5 + $0x38] sm:$0xf]
        %v771 = vld [vmem:[#allocation5 + $0x3c] sm:$0xf]
        %v772 = vld [vmem:[#allocation5 + $0x40] sm:$0xf]
        %v773 = vld [vmem:[#allocation5 + $0x44] sm:$0xf]
        %v774 = vld [vmem:[#allocation5 + $0x48] sm:$0xf]
        %v775 = vld [vmem:[#allocation5 + $0x4c] sm:$0xf]
        %v776 = vld [vmem:[#allocation5 + $0x50] sm:$0xf]
        %v777 = vld [vmem:[#allocation5 + $0x54] sm:$0xf]
        %v778 = vld [vmem:[#allocation5 + $0x58] sm:$0xf]
        %v779 = vld [vmem:[#allocation5 + $0x5c] sm:$0xf]
        %v780 = vld [vmem:[#allocation5 + $0x60] sm:$0xf]
        %v781 = vld [vmem:[#allocation5 + $0x64] sm:$0xf]
        %v782 = vld [vmem:[#allocation5 + $0x68] sm:$0xf]
        %v783 = vld [vmem:[#allocation5 + $0x6c] sm:$0xf]
        %v784 = vld [vmem:[#allocation5 + $0x70] sm:$0xf]
        %v785 = vld [vmem:[#allocation5 + $0x74] sm:$0xf]
        %v786 = vld [vmem:[#allocation5 + $0x78] sm:$0xf]
        %v787 = vld [vmem:[#allocation5 + $0x7c] sm:$0xf]
        %v788 = vld [vmem:[#allocation5 + $0x80] sm:$0xf]
        %v789 = vld [vmem:[#allocation5 + $0x84] sm:$0xf]
        %v790 = vld [vmem:[#allocation5 + $0x88] sm:$0xf]
        %v791 = vld [vmem:[#allocation5 + $0x8c] sm:$0xf]
        %v792 = vld [vmem:[#allocation5 + $0x90] sm:$0xf]
        %v793 = vld [vmem:[#allocation5 + $0x94] sm:$0xf]
        %v794 = vld [vmem:[#allocation5 + $0x98] sm:$0xf]
        %v795 = vld [vmem:[#allocation5 + $0x9c] sm:$0xf]
        %v796 = vld [vmem:[#allocation5 + $0xa0] sm:$0xf]
        %v797 = vld [vmem:[#allocation5 + $0xa4] sm:$0xf]
        %v798 = vld [vmem:[#allocation5 + $0xa8] sm:$0xf]
        %v799 = vld [vmem:[#allocation5 + $0xac] sm:$0xf]
        %v800 = vld [vmem:[#allocation5 + $0xb0] sm:$0xf]
        %v801 = vld [vmem:[#allocation5 + $0xb4] sm:$0xf]
        %v802 = vld [vmem:[#allocation5 + $0xb8] sm:$0xf]
        %v803 = vld [vmem:[#allocation5 + $0xbc] sm:$0xf]
        %v804 = vld [vmem:[#allocation5 + $0xc0] sm:$0xf]
        %v805 = vld [vmem:[#allocation5 + $0xc4] sm:$0xf]
        %v806 = vld [vmem:[#allocation5 + $0xc8] sm:$0xf]
        %v807 = vld [vmem:[#allocation5 + $0xcc] sm:$0xf]
        %v808 = vld [vmem:[#allocation5 + $0xd0] sm:$0xf]
        %v809 = vld [vmem:[#allocation5 + $0xd4] sm:$0xf]
        %v810 = vld [vmem:[#allocation5 + $0xd8] sm:$0xf]
        %v811 = vld [vmem:[#allocation5 + $0xdc] sm:$0xf]
        %v812 = vld [vmem:[#allocation5 + $0xe0] sm:$0xf]
        %v813 = vld [vmem:[#allocation5 + $0xe4] sm:$0xf]
        %v814 = vld [vmem:[#allocation5 + $0xe8] sm:$0xf]
        %v815 = vld [vmem:[#allocation5 + $0xec] sm:$0xf]
        %v816 = vld [vmem:[#allocation5 + $0xf0] sm:$0xf]
        %v817 = vld [vmem:[#allocation5 + $0xf4] sm:$0xf]
        %v818 = vld [vmem:[#allocation5 + $0xf8] sm:$0xf]
        %v819 = vld [vmem:[#allocation5 + $0xfc] sm:$0xf]
        %v820 = vld [vmem:[#allocation5 + $0x100] sm:$0xf]
        %v821 = vld [vmem:[#allocation5 + $0x104] sm:$0xf]
        %v822 = vld [vmem:[#allocation5 + $0x108] sm:$0xf]
        %v823 = vld [vmem:[#allocation5 + $0x10c] sm:$0xf]
        %v824 = vld [vmem:[#allocation5 + $0x110] sm:$0xf]
        %v825 = vld [vmem:[#allocation5 + $0x114] sm:$0xf]
        %v826 = vld [vmem:[#allocation5 + $0x118] sm:$0xf]
        %v827 = vld [vmem:[#allocation5 + $0x11c] sm:$0xf]
        %v828 = vld [vmem:[#allocation5 + $0x120] sm:$0xf]
        %v829 = vld [vmem:[#allocation5 + $0x124] sm:$0xf]
        %v830 = vld [vmem:[#allocation5 + $0x128] sm:$0xf]
        %v831 = vld [vmem:[#allocation5 + $0x12c] sm:$0xf]
        %v832 = vld [vmem:[#allocation5 + $0x130] sm:$0xf]
        %v833 = vld [vmem:[#allocation5 + $0x134] sm:$0xf]
        %v834 = vld [vmem:[#allocation5 + $0x138] sm:$0xf]
        %v835 = vld [vmem:[#allocation5 + $0x13c] sm:$0xf]
        %v836 = vld [vmem:[#allocation5 + $0x140] sm:$0xf]
        %v837 = vld [vmem:[#allocation5 + $0x144] sm:$0xf]
        %v838 = vld [vmem:[#allocation5 + $0x148] sm:$0xf]
        %v839 = vld [vmem:[#allocation5 + $0x14c] sm:$0xf]
        %v840 = vld [vmem:[#allocation5 + $0x150] sm:$0xf]
        %v841 = vld [vmem:[#allocation5 + $0x154] sm:$0xf]
        %v842 = vld [vmem:[#allocation5 + $0x158] sm:$0xf]
        %v843 = vld [vmem:[#allocation5 + $0x15c] sm:$0xf]
        %v844 = vld [vmem:[#allocation5 + $0x160] sm:$0xf]
        %v845 = vld [vmem:[#allocation5 + $0x164] sm:$0xf]
        %v846 = vld [vmem:[#allocation5 + $0x168] sm:$0xf]
        %v847 = vld [vmem:[#allocation5 + $0x16c] sm:$0xf]
        %v848 = vld [vmem:[#allocation5 + $0x170] sm:$0xf]
        %v849 = vld [vmem:[#allocation5 + $0x174] sm:$0xf]
        %v850 = vld [vmem:[#allocation5 + $0x178] sm:$0xf]
        %v851 = vld [vmem:[#allocation5 + $0x17c] sm:$0xf]
        %v852 = vld [vmem:[%s6] sm:$0x1]
        %v854 = vperm.slane %v852, 0
        %v952 = vunpack.c.l.b16 %v756
        %v953 = vunpack.c.l.b16 %v757
        %v954 = vunpack.c.l.b16 %v758
        %v955 = vunpack.c.l.b16 %v759
        %v956 = vunpack.c.l.b16 %v760
        %v957 = vunpack.c.l.b16 %v761
        %v958 = vunpack.c.l.b16 %v762
        %v959 = vunpack.c.l.b16 %v763
        %v960 = vunpack.c.l.b16 %v764
        %v961 = vunpack.c.l.b16 %v765
        %v962 = vunpack.c.l.b16 %v766
        %v963 = vunpack.c.l.b16 %v767
        %v964 = vunpack.c.l.b16 %v768
        %v965 = vunpack.c.l.b16 %v769
        %v966 = vunpack.c.l.b16 %v770
        %v967 = vunpack.c.l.b16 %v771
        %v968 = vunpack.c.l.b16 %v772
        %v969 = vunpack.c.l.b16 %v773
        %v970 = vunpack.c.l.b16 %v774
        %v971 = vunpack.c.l.b16 %v775
        %v972 = vunpack.c.l.b16 %v776
        %v973 = vunpack.c.l.b16 %v777
        %v974 = vunpack.c.l.b16 %v778
        %v975 = vunpack.c.l.b16 %v779
        %v976 = vunpack.c.l.b16 %v780
        %v977 = vunpack.c.l.b16 %v781
        %v978 = vunpack.c.l.b16 %v782
        %v979 = vunpack.c.l.b16 %v783
        %v980 = vunpack.c.l.b16 %v784
        %v981 = vunpack.c.l.b16 %v785
        %v982 = vunpack.c.l.b16 %v786
        %v983 = vunpack.c.l.b16 %v787
        %v984 = vunpack.c.l.b16 %v788
        %v985 = vunpack.c.l.b16 %v789
        %v986 = vunpack.c.l.b16 %v790
        %v987 = vunpack.c.l.b16 %v791
        %v988 = vunpack.c.l.b16 %v792
        %v989 = vunpack.c.l.b16 %v793
        %v990 = vunpack.c.l.b16 %v794
        %v991 = vunpack.c.l.b16 %v795
        %v992 = vunpack.c.l.b16 %v796
        %v993 = vunpack.c.l.b16 %v797
        %v994 = vunpack.c.l.b16 %v798
        %v995 = vunpack.c.l.b16 %v799
        %v996 = vunpack.c.l.b16 %v800
        %v997 = vunpack.c.l.b16 %v801
        %v998 = vunpack.c.l.b16 %v802
        %v999 = vunpack.c.l.b16 %v803
        %v1000 = vunpack.c.l.b16 %v804
        %v1001 = vunpack.c.l.b16 %v805
        %v1002 = vunpack.c.l.b16 %v806
        %v1003 = vunpack.c.l.b16 %v807
        %v1004 = vunpack.c.l.b16 %v808
        %v1005 = vunpack.c.l.b16 %v809
        %v1006 = vunpack.c.l.b16 %v810
        %v1007 = vunpack.c.l.b16 %v811
        %v1008 = vunpack.c.l.b16 %v812
        %v1009 = vunpack.c.l.b16 %v813
        %v1010 = vunpack.c.l.b16 %v814
        %v1011 = vunpack.c.l.b16 %v815
        %v1012 = vunpack.c.l.b16 %v816
        %v1013 = vunpack.c.l.b16 %v817
        %v1014 = vunpack.c.l.b16 %v818
        %v1015 = vunpack.c.l.b16 %v819
        %v1016 = vunpack.c.l.b16 %v820
        %v1017 = vunpack.c.l.b16 %v821
        %v1018 = vunpack.c.l.b16 %v822
        %v1019 = vunpack.c.l.b16 %v823
        %v1020 = vunpack.c.l.b16 %v824
        %v1021 = vunpack.c.l.b16 %v825
        %v1022 = vunpack.c.l.b16 %v826
        %v1023 = vunpack.c.l.b16 %v827
        %v1024 = vunpack.c.l.b16 %v828
        %v1025 = vunpack.c.l.b16 %v829
        %v1026 = vunpack.c.l.b16 %v830
        %v1027 = vunpack.c.l.b16 %v831
        %v1028 = vunpack.c.l.b16 %v832
        %v1029 = vunpack.c.l.b16 %v833
        %v1030 = vunpack.c.l.b16 %v834
        %v1031 = vunpack.c.l.b16 %v835
        %v1032 = vunpack.c.l.b16 %v836
        %v1033 = vunpack.c.l.b16 %v837
        %v1034 = vunpack.c.l.b16 %v838
        %v1035 = vunpack.c.l.b16 %v839
        %v1036 = vunpack.c.l.b16 %v840
        %v1037 = vunpack.c.l.b16 %v841
        %v1038 = vunpack.c.l.b16 %v842
        %v1039 = vunpack.c.l.b16 %v843
        %v1040 = vunpack.c.l.b16 %v844
        %v1041 = vunpack.c.l.b16 %v845
        %v1042 = vunpack.c.l.b16 %v846
        %v1043 = vunpack.c.l.b16 %v847
        %v1044 = vunpack.c.l.b16 %v848
        %v1045 = vunpack.c.l.b16 %v849
        %v1046 = vunpack.c.l.b16 %v850
        %v1047 = vunpack.c.l.b16 %v851
        %v1048 = vpack.c.b16 %v953, %v952
        %v1049 = vpack.c.b16 %v955, %v954
        %v1050 = vpack.c.b16 %v957, %v956
        %v1051 = vpack.c.b16 %v959, %v958
        %v1052 = vpack.c.b16 %v961, %v960
        %v1053 = vpack.c.b16 %v963, %v962
        %v1054 = vpack.c.b16 %v965, %v964
        %v1055 = vpack.c.b16 %v967, %v966
        %v1056 = vpack.c.b16 %v969, %v968
        %v1057 = vpack.c.b16 %v971, %v970
        %v1058 = vpack.c.b16 %v973, %v972
        %v1059 = vpack.c.b16 %v975, %v974
        %v1060 = vpack.c.b16 %v977, %v976
        %v1061 = vpack.c.b16 %v979, %v978
        %v1062 = vpack.c.b16 %v981, %v980
        %v1063 = vpack.c.b16 %v983, %v982
        %v1064 = vpack.c.b16 %v985, %v984
        %v1065 = vpack.c.b16 %v987, %v986
        %v1066 = vpack.c.b16 %v989, %v988
        %v1067 = vpack.c.b16 %v991, %v990
        %v1068 = vpack.c.b16 %v993, %v992
        %v1069 = vpack.c.b16 %v995, %v994
        %v1070 = vpack.c.b16 %v997, %v996
        %v1071 = vpack.c.b16 %v999, %v998
        %v1072 = vpack.c.b16 %v1001, %v1000
        %v1073 = vpack.c.b16 %v1003, %v1002
        %v1074 = vpack.c.b16 %v1005, %v1004
        %v1075 = vpack.c.b16 %v1007, %v1006
        %v1076 = vpack.c.b16 %v1009, %v1008
        %v1077 = vpack.c.b16 %v1011, %v1010
        %v1078 = vpack.c.b16 %v1013, %v1012
        %v1079 = vpack.c.b16 %v1015, %v1014
        %v1080 = vpack.c.b16 %v1017, %v1016
        %v1081 = vpack.c.b16 %v1019, %v1018
        %v1082 = vpack.c.b16 %v1021, %v1020
        %v1083 = vpack.c.b16 %v1023, %v1022
        %v1084 = vpack.c.b16 %v1025, %v1024
        %v1085 = vpack.c.b16 %v1027, %v1026
        %v1086 = vpack.c.b16 %v1029, %v1028
        %v1087 = vpack.c.b16 %v1031, %v1030
        %v1088 = vpack.c.b16 %v1033, %v1032
        %v1089 = vpack.c.b16 %v1035, %v1034
        %v1090 = vpack.c.b16 %v1037, %v1036
        %v1091 = vpack.c.b16 %v1039, %v1038
        %v1092 = vpack.c.b16 %v1041, %v1040
        %v1093 = vpack.c.b16 %v1043, %v1042
        %v1094 = vpack.c.b16 %v1045, %v1044
        %v1095 = vpack.c.b16 %v1047, %v1046
        %1144 = vmatpush.bf16.msra.mxu0 %v1055
        %1145 = vmatpush.bf16.msra.mxu0 %v1054
        %1146 = vmatpush.bf16.msra.mxu0 %v1053
        %1147 = vmatpush.bf16.msra.mxu0 %v1052
        %1148 = vmatpush.bf16.msra.mxu0 %v1051
        %1149 = vmatpush.bf16.msra.mxu0 %v1050
        %1150 = vmatpush.bf16.msra.mxu0 %v1049
        %1151 = vmatpush.bf16.msra.mxu0 %v1048
        %1152 = vmatmul.bf16.gmra.mxu0 %v750
        %v1153 = vpop.f32.mrf.mxu0
        %v1154 = vadd.f32 %v854, %v1153
        %v1155 = vpop.f32.mrf.mxu0
        %v1156 = vadd.f32 %v854, %v1155
        %1157 = vdwg.mxu0
        %1158 = vmatpush.bf16.msra.mxu0 %v1063
        %1159 = vmatpush.bf16.msra.mxu0 %v1062
        %1160 = vmatpush.bf16.msra.mxu0 %v1061
        %1161 = vmatpush.bf16.msra.mxu0 %v1060
        %1162 = vmatpush.bf16.msra.mxu0 %v1059
        %1163 = vmatpush.bf16.msra.mxu0 %v1058
        %1164 = vmatpush.bf16.msra.mxu0 %v1057
        %1165 = vmatpush.bf16.msra.mxu0 %v1056
        %1166 = vmatmul.bf16.gmra.mxu0 %v751
        %v1167 = vpop.f32.mrf.mxu0
        %v1168 = vadd.f32 %v1154, %v1167
        %v1169 = vpop.f32.mrf.mxu0
        %v1170 = vadd.f32 %v1156, %v1169
        %1171 = vdwg.mxu0
        %1172 = vmatpush.bf16.msra.mxu0 %v1071
        %1173 = vmatpush.bf16.msra.mxu0 %v1070
        %1174 = vmatpush.bf16.msra.mxu0 %v1069
        %1175 = vmatpush.bf16.msra.mxu0 %v1068
        %1176 = vmatpush.bf16.msra.mxu0 %v1067
        %1177 = vmatpush.bf16.msra.mxu0 %v1066
        %1178 = vmatpush.bf16.msra.mxu0 %v1065
        %1179 = vmatpush.bf16.msra.mxu0 %v1064
        %1180 = vmatmul.bf16.gmra.mxu0 %v752
        %v1181 = vpop.f32.mrf.mxu0
        %v1182 = vadd.f32 %v1168, %v1181
        %v1183 = vpop.f32.mrf.mxu0
        %v1184 = vadd.f32 %v1170, %v1183
        %1185 = vdwg.mxu0
        %1186 = vmatpush.bf16.msra.mxu0 %v1079
        %1187 = vmatpush.bf16.msra.mxu0 %v1078
        %1188 = vmatpush.bf16.msra.mxu0 %v1077
        %1189 = vmatpush.bf16.msra.mxu0 %v1076
        %1190 = vmatpush.bf16.msra.mxu0 %v1075
        %1191 = vmatpush.bf16.msra.mxu0 %v1074
        %1192 = vmatpush.bf16.msra.mxu0 %v1073
        %1193 = vmatpush.bf16.msra.mxu0 %v1072
        %1194 = vmatmul.bf16.gmra.mxu0 %v753
        %v1195 = vpop.f32.mrf.mxu0
        %v1196 = vadd.f32 %v1182, %v1195
        %v1197 = vpop.f32.mrf.mxu0
        %v1198 = vadd.f32 %v1184, %v1197
        %1199 = vdwg.mxu0
        %1200 = vmatpush.bf16.msra.mxu0 %v1087
        %1201 = vmatpush.bf16.msra.mxu0 %v1086
        %1202 = vmatpush.bf16.msra.mxu0 %v1085
        %1203 = vmatpush.bf16.msra.mxu0 %v1084
        %1204 = vmatpush.bf16.msra.mxu0 %v1083
        %1205 = vmatpush.bf16.msra.mxu0 %v1082
        %1206 = vmatpush.bf16.msra.mxu0 %v1081
        %1207 = vmatpush.bf16.msra.mxu0 %v1080
        %1208 = vmatmul.bf16.gmra.mxu0 %v754
        %v1209 = vpop.f32.mrf.mxu0
        %v1210 = vadd.f32 %v1196, %v1209
        %v1211 = vpop.f32.mrf.mxu0
        %v1212 = vadd.f32 %v1198, %v1211
        %1213 = vdwg.mxu0
        %1214 = vmatpush.bf16.msra.mxu0 %v1095
        %1215 = vmatpush.bf16.msra.mxu0 %v1094
        %1216 = vmatpush.bf16.msra.mxu0 %v1093
        %1217 = vmatpush.bf16.msra.mxu0 %v1092
        %1218 = vmatpush.bf16.msra.mxu0 %v1091
        %1219 = vmatpush.bf16.msra.mxu0 %v1090
        %1220 = vmatpush.bf16.msra.mxu0 %v1089
        %1221 = vmatpush.bf16.msra.mxu0 %v1088
        %1222 = vmatmul.bf16.gmra.mxu0 %v755
        %v1223 = vpop.f32.mrf.mxu0
        %v1224 = vadd.f32 %v1210, %v1223
        %v1225 = vpop.f32.mrf.mxu0
        %v1226 = vadd.f32 %v1212, %v1225
        %1227 = vdwg.mxu0
        %v1228 = vpack.c.bf16 %v1224, %v1224
        %v1229 = vpack.c.bf16 %v1226, %v1226
        %1230 = vst [vmem:[%s306] sm:$0xf] %v1228
        %1231 = vst [vmem:[%s306 + $0x4] sm:$0xf] %v1229
        %s1232 = sand.u32 %s183, 1
        %s1233 = scalar_lea.sflag [#allocation4], %s1232
        %s1234 = sand.u32 %s183, 1
        %s1235 = smul.addr %s1234, 8
        %s1236 = scalar_lea.vmem [#allocation7], %s1235
        // Predicated region
        $region57: #{tpu_custom_call.1} parent=47 // pred_check
          %p1237 = pneg %p193
        $region58: #{tpu_custom_call.1} parent=47 // pred_check_branch
          %1239 = sbr.rel (%p1237) target = $region60
        $region59: #{tpu_custom_call.1} parent=47 // pred_region
          %s1240 = smul.u32 2, %s23
          %1242 = vsyncadd %s1233, 0
          %s1243 = smul.addr %s1240, 4
          %s1244 = scalar_lea.hbm %s7, %s1243
          %s1245 = sshll.u32 %s1236, 4
          %s1246 = int_to_ptr.vmem [resolvable:$true] %s1245
          %s1247 = sshll.u32 %s1244, 4
          %s1248 = int_to_ptr.hbm [resolvable:$true] %s1247
          %1253 = dma.vmem_to_hbm [thread:$0]  %s1246, 128, %s1248, %s1233, 64, 64, 4
        $region60: #{tpu_custom_call.1} parent=47 // pred_fallthru
          _
      $region48: #{tpu_custom_call.1} parent=5 // pred_fallthru
        _
      %p1254 = scmp.le.s32.totalorder 2, %s18
      // Predicated region
      $region61: #{tpu_custom_call.1} parent=5 // pred_check
        %p1255 = pneg %p1254
      $region62: #{tpu_custom_call.1} parent=5 // pred_check_branch
        %1257 = sbr.rel (%p1255) target = $region64
      $region63: #{tpu_custom_call.1} parent=5 // pred_region
        %s1258 = ssub.s32 %s18, 2
        // Predicated region
        $region65: #{tpu_custom_call.1} parent=63 // pred_check
          %p1259 = pneg %p199
        $region66: #{tpu_custom_call.1} parent=63 // pred_check_branch
          %1261 = sbr.rel (%p1259) target = $region68
        $region67: #{tpu_custom_call.1} parent=63 // pred_region
          %s1262 = sand.u32 %s184, 1
          %s1263 = scalar_lea.sflag [#allocation4], %s1262
          %s1264 = sand.u32 %s184, 1
          %s1265 = smul.addr %s1264, 8
          %s1266 = scalar_lea.vmem [#allocation7], %s1265
          %1268 = dma.done %s1263, 128
        $region68: #{tpu_custom_call.1} parent=63 // pred_fallthru
          _
      $region64: #{tpu_custom_call.1} parent=5 // pred_fallthru
        _
    $region6: #{tpu_custom_call.1} parent=1 // loop_footer
      %s22 = sadd.s32 1, %s18
    $region7: #{tpu_custom_call.1} parent=1 // loop_footer_branch
      %17 = sbr.rel target = $region3
    $region8: #{tpu_custom_call.1} parent=1 // loop_exit
      _
    %1269 = vsyncpa [#allocation3], 1
    %s1270 = scalar_lea.sflag [#allocation3], 1
    %1271 = vsyncpa %s1270, 1
    %1272 = vsyncpa [#allocation6], 1
    %1273 = vsyncpa [#allocation4], 1
    %s1274 = scalar_lea.sflag [#allocation4], 1
    %1275 = vsyncpa %s1274, 1

</llo_original>
